<compile_context>
chip_gen: v7x
topology: tpu7x:2x2x1
jax: 0.10.0
libtpu: 0.0.40
codegen_flags: <defaults>
</compile_context>

<pallas_src>
import jax
import jax.numpy as jnp
from jax.experimental import pallas as pl
from jax.experimental.pallas import tpu as pltpu


LANE = 128                          # TPU lane width (last dim)
SUBLANE = 8                         # f32 sublane granularity (2nd-to-last dim)
TILE_LANES = 1024                   # lane-dense tile width (multiple of 128)
MAX_TILE_BYTES = 2 * 1024 * 1024    # ~2 MiB per tile -> ~8 MiB double-buffered


def _svi_kernel(params_ref, x_ref, o_ref):
    # params_ref: SMEM (5,) f32 -> [a, b, rho, m, sigma^2]
    # x_ref, o_ref: VMEM tiles (tm, tn) f32
    a = params_ref[0]
    b = params_ref[1]
    rho = params_ref[2]
    m = params_ref[3]
    sigma_sq = params_ref[4]

    xm = x_ref[...] - m
    o_ref[...] = a + b * (rho * xm + jnp.sqrt(xm * xm + sigma_sq))


def _round_up(x, n):
    return ((x + n - 1) // n) * n


def svi_forward(log_moneyness, params):
    """Pallas implementation of RegularizedSVIModel.forward.

    log_moneyness: float array of any shape
    params:        f32 [5] = [a, b, rho, m, sigma]
    returns:       f32 array with the same shape as log_moneyness
    """
    x = jnp.asarray(log_moneyness, dtype=jnp.float32)
    orig_shape = x.shape

    # Flatten and re-lay out as a lane-dense (rows, tn) slab.
    flat = x.reshape(-1)
    total = max(int(flat.shape[0]), 1)

    tn = min(_round_up(total, LANE), TILE_LANES)          # lane width
    rows = -(-total // tn)                                # ceil(total / tn)

    # Choose row-tile so one tile is <= ~2 MiB (but at least one vreg tall).
    max_tm = max(SUBLANE, (MAX_TILE_BYTES // (4 * tn)) // SUBLANE * SUBLANE)
    tm = min(_round_up(rows, SUBLANE), max_tm)

    rows_p = _round_up(rows, tm)
    padded_total = rows_p * tn
    if padded_total != flat.shape[0]:
        flat = jnp.pad(flat, (0, padded_total - flat.shape[0]))
    x2 = flat.reshape(rows_p, tn)

    # Precompute sigma^2 in the wrapper; kernel sees [a, b, rho, m, sigma^2].
    p = jnp.asarray(params, dtype=jnp.float32)
    kernel_params = jnp.stack([p[0], p[1], p[2], p[3], p[4] * p[4]])

    grid = (rows_p // tm,)

    out = pl.pallas_call(
        _svi_kernel,
        out_shape=jax.ShapeDtypeStruct((rows_p, tn), jnp.float32),
        grid=grid,
        in_specs=[
            # scalar parameters: whole (5,) vector in SMEM every step
            pl.BlockSpec(memory_space=pltpu.MemorySpace.SMEM),
            # lane-dense data tile
            pl.BlockSpec((tm, tn), lambda i: (i, 0)),
        ],
        out_specs=pl.BlockSpec((tm, tn), lambda i: (i, 0)),
        compiler_params=pltpu.CompilerParams(
            dimension_semantics=("parallel",)
        ),
    )(kernel_params, x2)

    out = out.reshape(-1)[: int(jnp.size(x))]
    return out.reshape(orig_shape)


def svi_forward_ref(log_moneyness, params):
    a, b, rho, m, sigma = [params[k] for k in range(5)]
    xm = log_moneyness - m
    return a + b * (rho * xm + jnp.sqrt(xm * xm + sigma * sigma))


if __name__ == "__main__":
    # Deterministic parameter init, matching nn.Parameter defaults in __init__:
    # a=0.05, b=0.2, rho=0.0, m=0.0, sigma=0.1
    params = jnp.array([0.05, 0.2, 0.0, 0.0, 0.1], dtype=jnp.float32)

    key = jax.random.PRNGKey(0)
    k1, k2, k3 = jax.random.split(key, 3)

    # Small deterministic inputs, including shapes that don't divide tiles
    # (exercises the pad / lane-dense relayout path) and a 1-D strike vector.
    test_inputs = [
        jax.random.normal(k1, (16, 256), dtype=jnp.float32) * 0.3,
        jax.random.normal(k2, (13, 200), dtype=jnp.float32) * 0.3,
        jax.random.normal(k3, (97,), dtype=jnp.float32) * 0.3,
    ]

    for lm in test_inputs:
        out = jax.block_until_ready(svi_forward(lm, params))
        ref = svi_forward_ref(lm, params)
        assert out.shape == ref.shape and out.dtype == jnp.float32
        assert jnp.allclose(out, ref, atol=1e-6, rtol=1e-6), "mismatch vs reference"

    print("KERNEL_OK")
</pallas_src>

<mosaic_0001>
module attributes {stable_mosaic.version = 11 : i64} {
  func.func @_svi_kernel(%arg0: i32, %arg1: memref<5xf32, #tpu.memory_space<smem>>, %arg2: memref<8x1024xf32, #tpu.memory_space<vmem>>, %arg3: memref<8x1024xf32, #tpu.memory_space<vmem>>) attributes {dimension_semantics = [#tpu.dimension_semantics<parallel>], iteration_bounds = array<i64: 1>, scalar_prefetch = 0 : i64, scratch_operands = 0 : i64, tpu.core_type = #tpu.core_type<tc>, window_params = [{transform_indices = @transform_0, window_bounds = array<i64: 5>}, {transform_indices = @transform_1, window_bounds = array<i64: 8, 1024>}, {transform_indices = @transform_2, window_bounds = array<i64: 8, 1024>}]} {
    %c0 = arith.constant 0 : index
    %0 = memref.load %arg1[%c0] : memref<5xf32, #tpu.memory_space<smem>>
    %c1 = arith.constant 1 : index
    %1 = memref.load %arg1[%c1] : memref<5xf32, #tpu.memory_space<smem>>
    %c2 = arith.constant 2 : index
    %2 = memref.load %arg1[%c2] : memref<5xf32, #tpu.memory_space<smem>>
    %c3 = arith.constant 3 : index
    %3 = memref.load %arg1[%c3] : memref<5xf32, #tpu.memory_space<smem>>
    %c4 = arith.constant 4 : index
    %4 = memref.load %arg1[%c4] : memref<5xf32, #tpu.memory_space<smem>>
    %c0_0 = arith.constant 0 : index
    %c0_1 = arith.constant 0 : index
    %5 = vector.load %arg2[%c0_0, %c0_1] : memref<8x1024xf32, #tpu.memory_space<vmem>>, vector<8x1024xf32>
    %6 = vector.broadcast %3 : f32 to vector<8x1024xf32>
    %7 = arith.subf %5, %6 : vector<8x1024xf32>
    %8 = vector.broadcast %2 : f32 to vector<8x1024xf32>
    %9 = arith.mulf %8, %7 : vector<8x1024xf32>
    %10 = arith.mulf %7, %7 : vector<8x1024xf32>
    %11 = vector.broadcast %4 : f32 to vector<8x1024xf32>
    %12 = arith.addf %10, %11 : vector<8x1024xf32>
    %13 = math.sqrt %12 : vector<8x1024xf32>
    %14 = arith.addf %9, %13 : vector<8x1024xf32>
    %15 = vector.broadcast %1 : f32 to vector<8x1024xf32>
    %16 = arith.mulf %15, %14 : vector<8x1024xf32>
    %17 = vector.broadcast %0 : f32 to vector<8x1024xf32>
    %18 = arith.addf %17, %16 : vector<8x1024xf32>
    %c0_2 = arith.constant 0 : index
    %c0_3 = arith.constant 0 : index
    %19 = vector.load %arg3[%c0_2, %c0_3] : memref<8x1024xf32, #tpu.memory_space<vmem>>, vector<8x1024xf32>
    tpu.vector_store %arg3[%c0_2, %c0_3], %18 {strides = array<i32>} : memref<8x1024xf32, #tpu.memory_space<vmem>>, vector<8x1024xf32>,
    return
  }
  func.func @transform_0(%arg0: i32) -> i32 {
    %c0_i32 = arith.constant 0 : i32
    %c0_i32_0 = arith.constant 0 : i32
    return %c0_i32 : i32
  }
  func.func @transform_1(%arg0: i32) -> (i32, i32) {
    %c0_i32 = arith.constant 0 : i32
    %c0_i32_0 = arith.constant 0 : i32
    return %arg0, %c0_i32 : i32, i32
  }
  func.func @transform_2(%arg0: i32) -> (i32, i32) {
    %c0_i32 = arith.constant 0 : i32
    %c0_i32_0 = arith.constant 0 : i32
    return %arg0, %c0_i32 : i32, i32
  }
}

</mosaic_0001>

<llo_original>
// kernel: tpu_custom_call.1
$region0: #{tpu_custom_call.1}
  #allocation0 [shape = 'u32[]', space=smem, size = 0x4, offset = 0x4, fixed_abs, tag = 'smem constant byte address 0x4 - core index']
  #allocation1 [shape = 'u32[144,128]{1,0:T(1,128)}', space=vmem, size = 0x12000, scoped, tag = 'internal scratch']
  %s0 = inlined_call_operand.hbm [shape: f32[5], index: 0, kind: input, shape index: {}]
  %s1 = inlined_call_operand.hbm [shape: f32[8,1024], index: 1, kind: input, shape index: {}]
  %s2 = inlined_call_operand.hbm [shape: f32[8,1024], index: 2, kind: output, shape index: {}]
  %s3 = sld [smem:[#allocation0]]
  $region26: #{tpu_custom_call.1} parent=0
    _
  %s5 = ssub.s32 1, %s3
  %s6 = scalar_select 0, %s5, %s3
  $region1: #{tpu_custom_call.1} parent=0
    #allocation2 [shape = 'u8[512]{0}', space=smem, size = 0x200, scoped, tag = 'input window, operand 0, single buffered']
    #allocation3 [shape = 's32[1]{0}', space=sflag, size = 0x4, scoped, tag = 'scoped memory for tpu_custom_call.1']
    #allocation4 [shape = 's32[1]{0}', space=sflag, size = 0x4, scoped, tag = 'scoped memory for tpu_custom_call.1']
    #allocation5 [shape = 's32[1]{0}', space=sflag, size = 0x4, scoped, tag = 'scoped memory for tpu_custom_call.1']
    #allocation6 [shape = 'u8[32768]{0}', space=vmem, size = 0x8000, scoped, tag = 'input window, operand 1, single buffered']
    #allocation7 [shape = 'u8[32768]{0}', space=vmem, size = 0x8000, scoped, tag = 'output window, operand 0, single buffered']
    %7 = vsyncpa [#allocation5], 0
    %8 = vsyncpa [#allocation3], 0
    %9 = vsyncpa [#allocation4], 0
    // Predicated region
    $region2: #{tpu_custom_call.1} parent=1 // pred_check
      _
    $region3: #{tpu_custom_call.1} parent=1 // pred_check_branch
      %11 = sbr.rel (0) target = $region5
    $region4: #{tpu_custom_call.1} parent=1 // pred_region
      %s13 = ssub.s32 16, 16
      %14 = vsyncadd [#allocation5], %s13
      %17 = dma.hbm_to_smem %s0, 16, [#allocation2], [#allocation5]
    $region5: #{tpu_custom_call.1} parent=1 // pred_fallthru
      _
    // Predicated region
    $region6: #{tpu_custom_call.1} parent=1 // pred_check
      _
    $region7: #{tpu_custom_call.1} parent=1 // pred_check_branch
      %19 = sbr.rel (0) target = $region9
    $region8: #{tpu_custom_call.1} parent=1 // pred_region
      %s21 = ssub.s32 1024, 1024
      %22 = vsyncadd [#allocation3], %s21
      %s24 = sshll.u32 [#allocation6], 4
      %s25 = int_to_ptr.vmem [resolvable:$true] %s24
      %27 = dma.hbm_to_vmem [thread:$0]  %s1, 1024, %s25, [#allocation3]
    $region9: #{tpu_custom_call.1} parent=1 // pred_fallthru
      _
    // Predicated region
    $region10: #{tpu_custom_call.1} parent=1 // pred_check
      _
    $region11: #{tpu_custom_call.1} parent=1 // pred_check_branch
      %29 = sbr.rel (0) target = $region13
    $region12: #{tpu_custom_call.1} parent=1 // pred_region
      %30 = dma.done [#allocation5], 16
    $region13: #{tpu_custom_call.1} parent=1 // pred_fallthru
      _
    // Predicated region
    $region14: #{tpu_custom_call.1} parent=1 // pred_check
      _
    $region15: #{tpu_custom_call.1} parent=1 // pred_check_branch
      %32 = sbr.rel (0) target = $region17
    $region16: #{tpu_custom_call.1} parent=1 // pred_region
      %33 = dma.done [#allocation3], 1024
    $region17: #{tpu_custom_call.1} parent=1 // pred_fallthru
      _
    %34 = sfence
    %s35 = sld [smem:[#allocation2]]
    %s36 = sld [smem:[#allocation2 + $0x1]]
    %s37 = sld [smem:[#allocation2 + $0x2]]
    %s38 = sld [smem:[#allocation2 + $0x3]]
    %s39 = sld [smem:[#allocation2 + $0x4]]
    %v40 = vld [vmem:[#allocation6] sm:$0xff]
    %v41 = vld [vmem:[#allocation6 + $0x8] sm:$0xff]
    %v42 = vld [vmem:[#allocation6 + $0x10] sm:$0xff]
    %v43 = vld [vmem:[#allocation6 + $0x18] sm:$0xff]
    %v44 = vld [vmem:[#allocation6 + $0x20] sm:$0xff]
    %v45 = vld [vmem:[#allocation6 + $0x28] sm:$0xff]
    %v46 = vld [vmem:[#allocation6 + $0x30] sm:$0xff]
    %v47 = vld [vmem:[#allocation6 + $0x38] sm:$0xff]
    %v48 = vstv %s38
    %v49 = vsub.f32 %v40, %v48
    %v50 = vsub.f32 %v41, %v48
    %v51 = vsub.f32 %v42, %v48
    %v52 = vsub.f32 %v43, %v48
    %v53 = vsub.f32 %v44, %v48
    %v54 = vsub.f32 %v45, %v48
    %v55 = vsub.f32 %v46, %v48
    %v56 = vsub.f32 %v47, %v48
    %v57 = vstv %s37
    %v58 = vmul.f32 %v57, %v49
    %v59 = vmul.f32 %v57, %v50
    %v60 = vmul.f32 %v57, %v51
    %v61 = vmul.f32 %v57, %v52
    %v62 = vmul.f32 %v57, %v53
    %v63 = vmul.f32 %v57, %v54
    %v64 = vmul.f32 %v57, %v55
    %v65 = vmul.f32 %v57, %v56
    %v66 = vmul.f32 %v49, %v49
    %v67 = vmul.f32 %v50, %v50
    %v68 = vmul.f32 %v51, %v51
    %v69 = vmul.f32 %v52, %v52
    %v70 = vmul.f32 %v53, %v53
    %v71 = vmul.f32 %v54, %v54
    %v72 = vmul.f32 %v55, %v55
    %v73 = vmul.f32 %v56, %v56
    %v74 = vstv %s39
    %v75 = vadd.f32 %v66, %v74
    %v76 = vadd.f32 %v67, %v74
    %v77 = vadd.f32 %v68, %v74
    %v78 = vadd.f32 %v69, %v74
    %v79 = vadd.f32 %v70, %v74
    %v80 = vadd.f32 %v71, %v74
    %v81 = vadd.f32 %v72, %v74
    %v82 = vadd.f32 %v73, %v74
    %v83 = vrsqrt.pop %v75
    %v84 = vmul.f32 %v75, %v83
    %vm85 = vcmp.eq.f32.partialorder %v75, inf
    %v86 = vsel %vm85, %v75, %v84
    %vm87 = vcmp.eq.f32.partialorder %v75, 0.0
    %v88 = vand.u32 %v75, 2147483648
    %v89 = vsel %vm87, %v88, %v86
    %v90 = vrsqrt.pop %v76
    %v91 = vmul.f32 %v76, %v90
    %vm92 = vcmp.eq.f32.partialorder %v76, inf
    %v93 = vsel %vm92, %v76, %v91
    %vm94 = vcmp.eq.f32.partialorder %v76, 0.0
    %v95 = vand.u32 %v76, 2147483648
    %v96 = vsel %vm94, %v95, %v93
    %v97 = vrsqrt.pop %v77
    %v98 = vmul.f32 %v77, %v97
    %vm99 = vcmp.eq.f32.partialorder %v77, inf
    %v100 = vsel %vm99, %v77, %v98
    %vm101 = vcmp.eq.f32.partialorder %v77, 0.0
    %v102 = vand.u32 %v77, 2147483648
    %v103 = vsel %vm101, %v102, %v100
    %v104 = vrsqrt.pop %v78
    %v105 = vmul.f32 %v78, %v104
    %vm106 = vcmp.eq.f32.partialorder %v78, inf
    %v107 = vsel %vm106, %v78, %v105
    %vm108 = vcmp.eq.f32.partialorder %v78, 0.0
    %v109 = vand.u32 %v78, 2147483648
    %v110 = vsel %vm108, %v109, %v107
    %v111 = vrsqrt.pop %v79
    %v112 = vmul.f32 %v79, %v111
    %vm113 = vcmp.eq.f32.partialorder %v79, inf
    %v114 = vsel %vm113, %v79, %v112
    %vm115 = vcmp.eq.f32.partialorder %v79, 0.0
    %v116 = vand.u32 %v79, 2147483648
    %v117 = vsel %vm115, %v116, %v114
    %v118 = vrsqrt.pop %v80
    %v119 = vmul.f32 %v80, %v118
    %vm120 = vcmp.eq.f32.partialorder %v80, inf
    %v121 = vsel %vm120, %v80, %v119
    %vm122 = vcmp.eq.f32.partialorder %v80, 0.0
    %v123 = vand.u32 %v80, 2147483648
    %v124 = vsel %vm122, %v123, %v121
    %v125 = vrsqrt.pop %v81
    %v126 = vmul.f32 %v81, %v125
    %vm127 = vcmp.eq.f32.partialorder %v81, inf
    %v128 = vsel %vm127, %v81, %v126
    %vm129 = vcmp.eq.f32.partialorder %v81, 0.0
    %v130 = vand.u32 %v81, 2147483648
    %v131 = vsel %vm129, %v130, %v128
    %v132 = vrsqrt.pop %v82
    %v133 = vmul.f32 %v82, %v132
    %vm134 = vcmp.eq.f32.partialorder %v82, inf
    %v135 = vsel %vm134, %v82, %v133
    %vm136 = vcmp.eq.f32.partialorder %v82, 0.0
    %v137 = vand.u32 %v82, 2147483648
    %v138 = vsel %vm136, %v137, %v135
    %v139 = vadd.f32 %v58, %v89
    %v140 = vadd.f32 %v59, %v96
    %v141 = vadd.f32 %v60, %v103
    %v142 = vadd.f32 %v61, %v110
    %v143 = vadd.f32 %v62, %v117
    %v144 = vadd.f32 %v63, %v124
    %v145 = vadd.f32 %v64, %v131
    %v146 = vadd.f32 %v65, %v138
    %v147 = vstv %s36
    %v148 = vmul.f32 %v147, %v139
    %v149 = vmul.f32 %v147, %v140
    %v150 = vmul.f32 %v147, %v141
    %v151 = vmul.f32 %v147, %v142
    %v152 = vmul.f32 %v147, %v143
    %v153 = vmul.f32 %v147, %v144
    %v154 = vmul.f32 %v147, %v145
    %v155 = vmul.f32 %v147, %v146
    %v156 = vstv %s35
    %v157 = vadd.f32 %v156, %v148
    %v158 = vadd.f32 %v156, %v149
    %v159 = vadd.f32 %v156, %v150
    %v160 = vadd.f32 %v156, %v151
    %v161 = vadd.f32 %v156, %v152
    %v162 = vadd.f32 %v156, %v153
    %v163 = vadd.f32 %v156, %v154
    %v164 = vadd.f32 %v156, %v155
    %165 = vst [vmem:[#allocation7] sm:$0xff] %v157
    %166 = vst [vmem:[#allocation7 + $0x8] sm:$0xff] %v158
    %167 = vst [vmem:[#allocation7 + $0x10] sm:$0xff] %v159
    %168 = vst [vmem:[#allocation7 + $0x18] sm:$0xff] %v160
    %169 = vst [vmem:[#allocation7 + $0x20] sm:$0xff] %v161
    %170 = vst [vmem:[#allocation7 + $0x28] sm:$0xff] %v162
    %171 = vst [vmem:[#allocation7 + $0x30] sm:$0xff] %v163
    %172 = vst [vmem:[#allocation7 + $0x38] sm:$0xff] %v164
    // Predicated region
    $region18: #{tpu_custom_call.1} parent=1 // pred_check
      _
    $region19: #{tpu_custom_call.1} parent=1 // pred_check_branch
      %174 = sbr.rel (0) target = $region21
    $region20: #{tpu_custom_call.1} parent=1 // pred_region
      %s176 = ssub.s32 1024, 1024
      %177 = vsyncadd [#allocation4], %s176
      %s179 = sshll.u32 [#allocation7], 4
      %s180 = int_to_ptr.vmem [resolvable:$true] %s179
      %182 = dma.vmem_to_hbm [thread:$0]  %s180, 1024, %s2, [#allocation4]
    $region21: #{tpu_custom_call.1} parent=1 // pred_fallthru
      _
    // Predicated region
    $region22: #{tpu_custom_call.1} parent=1 // pred_check
      _
    $region23: #{tpu_custom_call.1} parent=1 // pred_check_branch
      %184 = sbr.rel (0) target = $region25
    $region24: #{tpu_custom_call.1} parent=1 // pred_region
      %185 = dma.done [#allocation4], 1024
    $region25: #{tpu_custom_call.1} parent=1 // pred_fallthru
      _
    %186 = vsyncpa [#allocation3], 1
    %187 = vsyncpa [#allocation4], 1
    %188 = vsyncpa [#allocation5], 1

</llo_original>
